<compile_context>
chip_gen: v5e
topology: v5e:2x2
jax: 0.10.0
libtpu: 0.0.40
codegen_flags: <defaults>
</compile_context>

<pallas_src>
import jax
import jax.numpy as jnp
from jax import lax
from jax.experimental import pallas as pl
from jax.experimental.pallas import tpu as pltpu


def _round_up(x, m):
    return ((x + m - 1) // m) * m


def _sublane_multiple(dtype):
    # f32 -> 8, bf16/f16 -> 16, int8/fp8 -> 32 (packed sublane tiles).
    return max(8, 32 // max(jnp.dtype(dtype).itemsize, 1))


def _vmem_capacity_bytes():
    try:
        info = pltpu.get_tpu_info()
        cap = getattr(info, "vmem_capacity_bytes", None)
        if cap:
            return int(cap)
    except Exception:
        pass
    return 64 << 20  # conservative fallback: v7x per-TensorCore VMEM


def _pick_tk_ff(d_ff):
    # d_ff chunk width: a multiple of 128 that divides d_ff (lane-aligned W1
    # column slices / sublane-aligned W2 row slices).  Fall back to full d_ff.
    for cand in (2048, 1024, 512, 256, 128):
        if d_ff > cand and d_ff % cand == 0:
            return cand
    return d_ff


def _make_resident_kernel(d_ff, tk_ff):
    """Weights fully resident in VMEM; d_ff processed in lane-aligned chunks."""
    n_chunks = d_ff // tk_ff

    def kernel(x_ref, w1_ref, b1_ref, w2_ref, b2_ref, o_ref, *scratch):
        # Cast LHS to the weight dtype so bf16 weights hit the fast MXU path
        # on GEMM #1 as well; accumulation stays f32.
        x = x_ref[...].astype(w1_ref.dtype)

        if n_chunks == 1:
            h = jnp.dot(x, w1_ref[...], preferred_element_type=jnp.float32)
            h = jnp.maximum(h + b1_ref[...].astype(jnp.float32), 0.0)
            # TODO(synk): eval-mode dropout is identity; training dropout
            # would draw a Bernoulli mask here.
            y = jnp.dot(h.astype(w2_ref.dtype), w2_ref[...],
                        preferred_element_type=jnp.float32)
            o_ref[...] = (y + b2_ref[...].astype(jnp.float32)).astype(o_ref.dtype)
            return

        acc_ref = scratch[0]
        acc_ref[...] = jnp.zeros_like(acc_ref)

        def body(k, carry):
            k0 = pl.multiple_of(k * tk_ff, tk_ff)
            h = jnp.dot(x, w1_ref[:, pl.ds(k0, tk_ff)],
                        preferred_element_type=jnp.float32)
            h = jnp.maximum(h + b1_ref[:, pl.ds(k0, tk_ff)].astype(jnp.float32),
                            0.0)
            acc_ref[...] += jnp.dot(h.astype(w2_ref.dtype),
                                    w2_ref[pl.ds(k0, tk_ff), :],
                                    preferred_element_type=jnp.float32)
            return carry

        lax.fori_loop(0, n_chunks, body, 0, unroll=n_chunks <= 8)
        o_ref[...] = (acc_ref[...] + b2_ref[...].astype(jnp.float32)).astype(
            o_ref.dtype)

    return kernel


def _streaming_kernel(x_ref, w1_ref, b1_ref, w2_ref, b2_ref, o_ref, acc_ref):
    """d_ff tiled as the trailing grid axis; P3 accumulator in VMEM scratch."""
    k = pl.program_id(1)

    @pl.when(k == 0)
    def _():
        acc_ref[...] = jnp.zeros_like(acc_ref)

    x = x_ref[...].astype(w1_ref.dtype)
    h = jnp.dot(x, w1_ref[...], preferred_element_type=jnp.float32)
    h = jnp.maximum(h + b1_ref[...].astype(jnp.float32), 0.0)
    acc_ref[...] += jnp.dot(h.astype(w2_ref.dtype), w2_ref[...],
                            preferred_element_type=jnp.float32)

    @pl.when(k == pl.num_programs(1) - 1)
    def _():
        o_ref[...] = (acc_ref[...] + b2_ref[...].astype(jnp.float32)).astype(
            o_ref.dtype)


def positionwise_feed_forward(x, w1, b1, w2, b2, *, tm=None, streaming=None):
    """Eval-mode Transformer FFN: relu(x @ w1 + b1) @ w2 + b2.

    x:  (batch, seq, d_model)
    w1: (d_model, d_ff), b1: (d_ff,)      (PyTorch Linear weight, transposed)
    w2: (d_ff, d_model), b2: (d_model,)
    Weights may be bf16 for 2x MXU throughput / half the resident VMEM;
    accumulation is f32 either way.  For lane-dense stores keep d_model a
    multiple of 128.
    """
    batch, seq, d_model = x.shape
    d_ff = w1.shape[1]
    n = batch * seq
    out_dtype = x.dtype

    # bf16 fast path: if the weights are narrower than x, cast x in the
    # wrapper (halves the x-tile DMA and feeds the MXU its fast dtype).
    x_dtype = w1.dtype if jnp.dtype(w1.dtype).itemsize < jnp.dtype(x.dtype).itemsize \
        else x.dtype
    x2 = x.reshape(n, d_model).astype(x_dtype)
    b1_2 = b1.reshape(1, d_ff)
    b2_2 = b2.reshape(1, d_model)

    itm_x = jnp.dtype(x_dtype).itemsize
    itm_o = jnp.dtype(out_dtype).itemsize
    w_bytes = sum(int(a.size) * a.dtype.itemsize for a in (w1, b1_2, w2, b2_2))

    sub = _sublane_multiple(x_dtype)
    tk_ff = _pick_tk_ff(d_ff)
    n_chunks = d_ff // tk_ff

    # Per-generation VMEM budget (v5e/v6e 128 MiB, v7x 64 MiB per core).
    cap = _vmem_capacity_bytes()
    budget = int(0.80 * cap)

    # Per-row VMEM: double-buffered x & out tiles + f32 accumulator + f32
    # h-chunk intermediate.
    per_row = 2 * d_model * itm_x + 2 * d_model * itm_o + d_model * 4 + tk_ff * 4

    # Resident (single-buffered) weights if they fit alongside a minimal row
    # tile; otherwise stream d_ff chunks from HBM via a second grid axis.
    resident_fits = (w_bytes + sub * per_row) <= budget
    use_streaming = (not resident_fits) if streaming is None else bool(streaming)

    if use_streaming:
        # Double-buffered W1/b1/W2 chunk tiles + b2.
        fixed = 2 * (d_model * tk_ff * w1.dtype.itemsize
                     + tk_ff * d_model * w2.dtype.itemsize
                     + tk_ff * b1.dtype.itemsize
                     + d_model * b2.dtype.itemsize)
    else:
        fixed = w_bytes  # single-buffered resident weights

    # Row tile: big for MXU occupancy, sublane-aligned, shrunk to the VMEM
    # budget and to the (rounded) row count.
    tm_max = tm if tm is not None else 512
    tm_eff = min(_round_up(tm_max, sub), _round_up(max(n, 1), sub))
    while tm_eff > sub and fixed + tm_eff * per_row > budget:
        tm_eff = max(sub, _round_up(tm_eff // 2, sub))

    n_tiles_m = int(pl.cdiv(n, tm_eff))
    est = fixed + tm_eff * per_row
    vmem_limit = int(min(cap - (2 << 20), max(est + (4 << 20), 16 << 20)))

    cost = pl.CostEstimate(
        flops=int(4 * n * d_model * d_ff),
        transcendentals=0,
        bytes_accessed=int(x2.size * itm_x
                           + w_bytes * (n_tiles_m if use_streaming else 1)
                           + n * d_model * itm_o))

    if use_streaming:
        out = pl.pallas_call(
            _streaming_kernel,
            out_shape=jax.ShapeDtypeStruct((n, d_model), out_dtype),
            grid_spec=pltpu.PrefetchScalarGridSpec(
                num_scalar_prefetch=0,
                grid=(n_tiles_m, n_chunks),
                in_specs=[
                    pl.BlockSpec((tm_eff, d_model), lambda i, k: (i, 0)),  # x
                    pl.BlockSpec((d_model, tk_ff), lambda i, k: (0, k)),   # W1
                    pl.BlockSpec((1, tk_ff), lambda i, k: (0, k)),         # b1
                    pl.BlockSpec((tk_ff, d_model), lambda i, k: (k, 0)),   # W2
                    pl.BlockSpec((1, d_model), lambda i, k: (0, 0)),       # b2
                ],
                out_specs=pl.BlockSpec((tm_eff, d_model), lambda i, k: (i, 0)),
                scratch_shapes=[pltpu.VMEM((tm_eff, d_model), jnp.float32)],
            ),
            compiler_params=pltpu.CompilerParams(
                dimension_semantics=("parallel", "arbitrary"),
                vmem_limit_bytes=vmem_limit),
            cost_estimate=cost,
        )(x2, w1, b1_2, w2, b2_2)
    else:
        kernel = _make_resident_kernel(d_ff, tk_ff)
        scratch_shapes = ([pltpu.VMEM((tm_eff, d_model), jnp.float32)]
                          if n_chunks > 1 else [])
        # Whole-array VMEM residency == single-buffered (no revolving bufs).
        resident_spec = pl.BlockSpec(memory_space=pltpu.MemorySpace.VMEM)
        out = pl.pallas_call(
            kernel,
            out_shape=jax.ShapeDtypeStruct((n, d_model), out_dtype),
            grid_spec=pltpu.PrefetchScalarGridSpec(
                num_scalar_prefetch=0,
                grid=(n_tiles_m,),
                in_specs=[
                    pl.BlockSpec((tm_eff, d_model), lambda i: (i, 0)),  # x rows
                    resident_spec,   # W1
                    resident_spec,   # b1
                    resident_spec,   # W2
                    resident_spec,   # b2
                ],
                out_specs=pl.BlockSpec((tm_eff, d_model), lambda i: (i, 0)),
                scratch_shapes=scratch_shapes,
            ),
            compiler_params=pltpu.CompilerParams(
                dimension_semantics=("parallel",),
                vmem_limit_bytes=vmem_limit),
            cost_estimate=cost,
        )(x2, w1, b1_2, w2, b2_2)

    return out.reshape(batch, seq, d_model)


if __name__ == "__main__":
    key = jax.random.PRNGKey(0)
    k_x, k_w1, k_b1, k_w2, k_b2, k_x2 = jax.random.split(key, 6)

    # Test 1: small, ragged row count (n = 18 -> one partial 24-row tile,
    # exercises Pallas's masked partial-block writes), d_ff chunked (2x128).
    batch, seq, d_model, d_ff = 2, 9, 128, 256
    x = jax.random.normal(k_x, (batch, seq, d_model), dtype=jnp.float32)
    w1 = jax.random.normal(k_w1, (d_model, d_ff), dtype=jnp.float32) * 0.1
    b1 = jax.random.normal(k_b1, (d_ff,), dtype=jnp.float32) * 0.1
    w2 = jax.random.normal(k_w2, (d_ff, d_model), dtype=jnp.float32) * 0.1
    b2 = jax.random.normal(k_b2, (d_model,), dtype=jnp.float32) * 0.1

    ref = jnp.maximum(x @ w1 + b1, 0.0) @ w2 + b2

    # Resident-weight path (auto-selected: weights fit VMEM).
    y = jax.block_until_ready(positionwise_feed_forward(x, w1, b1, w2, b2))
    assert y.shape == (batch, seq, d_model)
    assert jnp.allclose(y, ref, atol=1e-3, rtol=1e-3)

    # Forced d_ff-streaming path (grid-axis accumulator) — same numerics.
    y_s = jax.block_until_ready(
        positionwise_feed_forward(x, w1, b1, w2, b2, streaming=True))
    assert jnp.allclose(y_s, ref, atol=1e-3, rtol=1e-3)

    # Test 2: full (evenly dividing) row tile, larger widths, chunked d_ff.
    batch2, seq2, dm2, df2 = 4, 32, 256, 512
    x_b = jax.random.normal(k_x2, (batch2, seq2, dm2), dtype=jnp.float32)
    w1_b = jax.random.normal(k_w1, (dm2, df2), dtype=jnp.float32) * 0.1
    b1_b = jax.random.normal(k_b1, (df2,), dtype=jnp.float32) * 0.1
    w2_b = jax.random.normal(k_w2, (df2, dm2), dtype=jnp.float32) * 0.1
    b2_b = jax.random.normal(k_b2, (dm2,), dtype=jnp.float32) * 0.1

    ref_b = jnp.maximum(x_b @ w1_b + b1_b, 0.0) @ w2_b + b2_b
    y_b = jax.block_until_ready(
        positionwise_feed_forward(x_b, w1_b, b1_b, w2_b, b2_b))
    assert y_b.shape == (batch2, seq2, dm2)
    assert jnp.allclose(y_b, ref_b, atol=1e-3, rtol=1e-3)

    print("KERNEL_OK")
</pallas_src>

<mosaic_0001>
module attributes {stable_mosaic.version = 11 : i64} {
  func.func @kernel(%arg0: i32, %arg1: memref<24x128xf32, #tpu.memory_space<vmem>>, %arg2: memref<128x256xf32, #tpu.memory_space<vmem>>, %arg3: memref<1x256xf32, #tpu.memory_space<vmem>>, %arg4: memref<256x128xf32, #tpu.memory_space<vmem>>, %arg5: memref<1x128xf32, #tpu.memory_space<vmem>>, %arg6: memref<24x128xf32, #tpu.memory_space<vmem>>, %arg7: memref<24x128xf32, #tpu.memory_space<vmem>>) attributes {dimension_semantics = [#tpu.dimension_semantics<parallel>], iteration_bounds = array<i64: 1>, scalar_prefetch = 0 : i64, scratch_operands = 1 : i64, tpu.core_type = #tpu.core_type<tc>, window_params = [{transform_indices = @transform_0, window_bounds = array<i64: 24, 128>}, {pipeline_mode = #tpu.pipeline_mode<synchronous>, transform_indices = @transform_1, window_bounds = array<i64: 128, 256>}, {pipeline_mode = #tpu.pipeline_mode<synchronous>, transform_indices = @transform_2, window_bounds = array<i64: 1, 256>}, {pipeline_mode = #tpu.pipeline_mode<synchronous>, transform_indices = @transform_3, window_bounds = array<i64: 256, 128>}, {pipeline_mode = #tpu.pipeline_mode<synchronous>, transform_indices = @transform_4, window_bounds = array<i64: 1, 128>}, {transform_indices = @transform_5, window_bounds = array<i64: 24, 128>}]} {
    %c0 = arith.constant 0 : index
    %c0_0 = arith.constant 0 : index
    %0 = vector.load %arg1[%c0, %c0_0] : memref<24x128xf32, #tpu.memory_space<vmem>>, vector<24x128xf32>
    %cst = arith.constant 0.000000e+00 : f32
    %1 = vector.broadcast %cst : f32 to vector<24x128xf32>
    %c0_1 = arith.constant 0 : index
    %c0_2 = arith.constant 0 : index
    %2 = vector.load %arg7[%c0_1, %c0_2] : memref<24x128xf32, #tpu.memory_space<vmem>>, vector<24x128xf32>
    tpu.vector_store %arg7[%c0_1, %c0_2], %1 {strides = array<i32>} : memref<24x128xf32, #tpu.memory_space<vmem>>, vector<24x128xf32>,
    %c0_i32 = arith.constant 0 : i32
    %c128_i32 = arith.constant 128 : i32
    %3 = arith.muli %c0_i32, %c128_i32 : i32
    %4 = tpu.assume_multiple %3, 128 : i32
    %c0_3 = arith.constant 0 : index
    %5 = arith.index_cast %4 : i32 to index
    %6 = vector.load %arg2[%c0_3, %5] : memref<128x256xf32, #tpu.memory_space<vmem>>, vector<128x128xf32>
    %cst_4 = arith.constant dense<0.000000e+00> : vector<24x128xf32>
    %7 = tpu.matmul %0, %6, %cst_4 {dimension_numbers = #tpu.dot_dimension_numbers<[1], [0], [0], [1], [0, 0, 1, 1], [], []>} : vector<24x128xf32>, vector<128x128xf32>, vector<24x128xf32> -> vector<24x128xf32>
    %c0_5 = arith.constant 0 : index
    %8 = arith.index_cast %4 : i32 to index
    %9 = vector.load %arg3[%c0_5, %8] : memref<1x256xf32, #tpu.memory_space<vmem>>, vector<1x128xf32>
    %10 = vector.broadcast %9 : vector<1x128xf32> to vector<24x128xf32>
    %11 = arith.addf %7, %10 : vector<24x128xf32>
    %cst_6 = arith.constant 0.000000e+00 : f32
    %12 = vector.broadcast %cst_6 : f32 to vector<24x128xf32>
    %13 = arith.maximumf %11, %12 : vector<24x128xf32>
    %c0_7 = arith.constant 0 : index
    %c0_8 = arith.constant 0 : index
    %14 = vector.load %arg7[%c0_7, %c0_8] : memref<24x128xf32, #tpu.memory_space<vmem>>, vector<24x128xf32>
    %15 = arith.index_cast %4 : i32 to index
    %c0_9 = arith.constant 0 : index
    %16 = vector.load %arg4[%15, %c0_9] : memref<256x128xf32, #tpu.memory_space<vmem>>, vector<128x128xf32>
    %cst_10 = arith.constant dense<0.000000e+00> : vector<24x128xf32>
    %17 = tpu.matmul %13, %16, %cst_10 {dimension_numbers = #tpu.dot_dimension_numbers<[1], [0], [0], [1], [0, 0, 1, 1], [], []>} : vector<24x128xf32>, vector<128x128xf32>, vector<24x128xf32> -> vector<24x128xf32>
    %18 = arith.addf %14, %17 : vector<24x128xf32>
    %c0_11 = arith.constant 0 : index
    %c0_12 = arith.constant 0 : index
    %19 = vector.load %arg7[%c0_11, %c0_12] : memref<24x128xf32, #tpu.memory_space<vmem>>, vector<24x128xf32>
    tpu.vector_store %arg7[%c0_11, %c0_12], %18 {strides = array<i32>} : memref<24x128xf32, #tpu.memory_space<vmem>>, vector<24x128xf32>,
    %c1_i32 = arith.constant 1 : i32
    %c128_i32_13 = arith.constant 128 : i32
    %20 = arith.muli %c1_i32, %c128_i32_13 : i32
    %21 = tpu.assume_multiple %20, 128 : i32
    %c0_14 = arith.constant 0 : index
    %22 = arith.index_cast %21 : i32 to index
    %23 = vector.load %arg2[%c0_14, %22] : memref<128x256xf32, #tpu.memory_space<vmem>>, vector<128x128xf32>
    %cst_15 = arith.constant dense<0.000000e+00> : vector<24x128xf32>
    %24 = tpu.matmul %0, %23, %cst_15 {dimension_numbers = #tpu.dot_dimension_numbers<[1], [0], [0], [1], [0, 0, 1, 1], [], []>} : vector<24x128xf32>, vector<128x128xf32>, vector<24x128xf32> -> vector<24x128xf32>
    %c0_16 = arith.constant 0 : index
    %25 = arith.index_cast %21 : i32 to index
    %26 = vector.load %arg3[%c0_16, %25] : memref<1x256xf32, #tpu.memory_space<vmem>>, vector<1x128xf32>
    %27 = vector.broadcast %26 : vector<1x128xf32> to vector<24x128xf32>
    %28 = arith.addf %24, %27 : vector<24x128xf32>
    %cst_17 = arith.constant 0.000000e+00 : f32
    %29 = vector.broadcast %cst_17 : f32 to vector<24x128xf32>
    %30 = arith.maximumf %28, %29 : vector<24x128xf32>
    %c0_18 = arith.constant 0 : index
    %c0_19 = arith.constant 0 : index
    %31 = vector.load %arg7[%c0_18, %c0_19] : memref<24x128xf32, #tpu.memory_space<vmem>>, vector<24x128xf32>
    %32 = arith.index_cast %21 : i32 to index
    %c0_20 = arith.constant 0 : index
    %33 = vector.load %arg4[%32, %c0_20] : memref<256x128xf32, #tpu.memory_space<vmem>>, vector<128x128xf32>
    %cst_21 = arith.constant dense<0.000000e+00> : vector<24x128xf32>
    %34 = tpu.matmul %30, %33, %cst_21 {dimension_numbers = #tpu.dot_dimension_numbers<[1], [0], [0], [1], [0, 0, 1, 1], [], []>} : vector<24x128xf32>, vector<128x128xf32>, vector<24x128xf32> -> vector<24x128xf32>
    %35 = arith.addf %31, %34 : vector<24x128xf32>
    %c0_22 = arith.constant 0 : index
    %c0_23 = arith.constant 0 : index
    %36 = vector.load %arg7[%c0_22, %c0_23] : memref<24x128xf32, #tpu.memory_space<vmem>>, vector<24x128xf32>
    tpu.vector_store %arg7[%c0_22, %c0_23], %35 {strides = array<i32>} : memref<24x128xf32, #tpu.memory_space<vmem>>, vector<24x128xf32>,
    %c2_i32 = arith.constant 2 : i32
    %c0_24 = arith.constant 0 : index
    %c0_25 = arith.constant 0 : index
    %37 = vector.load %arg7[%c0_24, %c0_25] : memref<24x128xf32, #tpu.memory_space<vmem>>, vector<24x128xf32>
    %c0_26 = arith.constant 0 : index
    %c0_27 = arith.constant 0 : index
    %38 = vector.load %arg5[%c0_26, %c0_27] : memref<1x128xf32, #tpu.memory_space<vmem>>, vector<1x128xf32>
    %39 = vector.broadcast %38 : vector<1x128xf32> to vector<24x128xf32>
    %40 = arith.addf %37, %39 : vector<24x128xf32>
    %c0_28 = arith.constant 0 : index
    %c0_29 = arith.constant 0 : index
    %41 = vector.load %arg6[%c0_28, %c0_29] : memref<24x128xf32, #tpu.memory_space<vmem>>, vector<24x128xf32>
    tpu.vector_store %arg6[%c0_28, %c0_29], %40 {strides = array<i32>} : memref<24x128xf32, #tpu.memory_space<vmem>>, vector<24x128xf32>,
    return
  }
  func.func @transform_0(%arg0: i32) -> (i32, i32) {
    %c0_i32 = arith.constant 0 : i32
    %c0_i32_0 = arith.constant 0 : i32
    return %arg0, %c0_i32 : i32, i32
  }
  func.func @transform_1(%arg0: i32) -> (i32, i32) {
    %c0_i32 = arith.constant 0 : i32
    %c0_i32_0 = arith.constant 0 : i32
    %c0_i32_1 = arith.constant 0 : i32
    return %c0_i32, %c0_i32_0 : i32, i32
  }
  func.func @transform_2(%arg0: i32) -> (i32, i32) {
    %c0_i32 = arith.constant 0 : i32
    %c0_i32_0 = arith.constant 0 : i32
    %c0_i32_1 = arith.constant 0 : i32
    return %c0_i32, %c0_i32_0 : i32, i32
  }
  func.func @transform_3(%arg0: i32) -> (i32, i32) {
    %c0_i32 = arith.constant 0 : i32
    %c0_i32_0 = arith.constant 0 : i32
    %c0_i32_1 = arith.constant 0 : i32
    return %c0_i32, %c0_i32_0 : i32, i32
  }
  func.func @transform_4(%arg0: i32) -> (i32, i32) {
    %c0_i32 = arith.constant 0 : i32
    %c0_i32_0 = arith.constant 0 : i32
    %c0_i32_1 = arith.constant 0 : i32
    return %c0_i32, %c0_i32_0 : i32, i32
  }
  func.func @transform_5(%arg0: i32) -> (i32, i32) {
    %c0_i32 = arith.constant 0 : i32
    %c0_i32_0 = arith.constant 0 : i32
    return %arg0, %c0_i32 : i32, i32
  }
}

</mosaic_0001>

<llo_original>
// kernel: tpu_custom_call.1
$region0: #{tpu_custom_call.1}
  #allocation0 [shape = 'u32[]', space=smem, size = 0x4, offset = 0x4, fixed_abs, tag = 'smem constant byte address 0x4 - core index']
  #allocation1 [shape = 'u32[72,128]{1,0:T(1,128)}', space=vmem, size = 0x9000, scoped, tag = 'internal scratch']
  #allocation2 [shape = 'f32[24,128]{1,0:T(8,128)}', space=vmem, size = 0x3000, scoped, tag = 'scratch operand']
  %s0 = inlined_call_operand.hbm [shape: f32[18,128], index: 0, kind: input, shape index: {}]
  %s1 = inlined_call_operand.hbm [shape: f32[128,256], index: 1, kind: input, shape index: {}]
  %s2 = inlined_call_operand.hbm [shape: f32[1,256], index: 2, kind: input, shape index: {}]
  %s3 = inlined_call_operand.hbm [shape: f32[256,128], index: 3, kind: input, shape index: {}]
  %s4 = inlined_call_operand.vmem [shape: f32[1,128], index: 4, kind: input, shape index: {}]
  %s5 = inlined_call_operand.hbm [shape: f32[18,128], index: 5, kind: output, shape index: {}]
  %s6 = sld [smem:[#allocation0]]
  $region46: #{tpu_custom_call.1} parent=0
    _
  %s8 = ssub.s32 1, %s6
  %s9 = scalar_select 0, %s8, %s6
  $region1: #{tpu_custom_call.1} parent=0
    #allocation3 [shape = 'u8[12288]{0}', space=vmem, size = 0x3000, scoped, tag = 'input window, operand 0, single buffered']
    #allocation4 [shape = 's32[1]{0}', space=sflag, size = 0x4, scoped, tag = 'scoped memory for tpu_custom_call.1']
    #allocation5 [shape = 's32[1]{0}', space=sflag, size = 0x4, scoped, tag = 'scoped memory for tpu_custom_call.1']
    #allocation6 [shape = 'u8[131072]{0}', space=vmem, size = 0x20000, scoped, tag = 'input window, operand 1, single buffered']
    #allocation7 [shape = 's32[1]{0}', space=sflag, size = 0x4, scoped, tag = 'scoped memory for tpu_custom_call.1']
    #allocation8 [shape = 'u8[1024]{0}', space=vmem, size = 0x400, scoped, tag = 'input window, operand 2, single buffered']
    #allocation9 [shape = 'u8[131072]{0}', space=vmem, size = 0x20000, scoped, tag = 'input window, operand 3, single buffered']
    #allocation10 [shape = 's32[1]{0}', space=sflag, size = 0x4, scoped, tag = 'scoped memory for tpu_custom_call.1']
    #allocation11 [shape = 'u8[12288]{0}', space=vmem, size = 0x3000, scoped, tag = 'output window, operand 0, single buffered']
    %10 = vsyncpa [#allocation4], 0
    %11 = vsyncpa [#allocation7], 0
    %12 = vsyncpa [#allocation10], 0
    %13 = vsyncpa [#allocation5], 0
    // Predicated region
    $region2: #{tpu_custom_call.1} parent=1 // pred_check
      _
    $region3: #{tpu_custom_call.1} parent=1 // pred_check_branch
      %15 = sbr.rel (0) target = $region5
    $region4: #{tpu_custom_call.1} parent=1 // pred_region
      %17 = vsyncadd [#allocation4], 0
      %s18 = sshll.u32 %s0, 4
      %s19 = int_to_ptr.hbm [resolvable:$true] %s18
      %s20 = sshll.u32 [#allocation3], 4
      %s21 = int_to_ptr.vmem [resolvable:$true] %s20
      %26 = dma.hbm_to_vmem [thread:$0]  %s19, 384, %s21, [#allocation4], 128, 128, 8
    $region5: #{tpu_custom_call.1} parent=1 // pred_fallthru
      _
    // Predicated region
    $region6: #{tpu_custom_call.1} parent=1 // pred_check
      _
    $region7: #{tpu_custom_call.1} parent=1 // pred_check_branch
      %28 = sbr.rel (0) target = $region9
    $region8: #{tpu_custom_call.1} parent=1 // pred_region
      %30 = vsyncadd [#allocation7], 0
      %s31 = sshll.u32 %s1, 4
      %s32 = int_to_ptr.hbm [resolvable:$true] %s31
      %s33 = sshll.u32 [#allocation6], 4
      %s34 = int_to_ptr.vmem [resolvable:$true] %s33
      %39 = dma.hbm_to_vmem [thread:$0]  %s32, 4096, %s34, [#allocation7], 256, 256, 16
    $region9: #{tpu_custom_call.1} parent=1 // pred_fallthru
      _
    // Predicated region
    $region10: #{tpu_custom_call.1} parent=1 // pred_check
      _
    $region11: #{tpu_custom_call.1} parent=1 // pred_check_branch
      %41 = sbr.rel (0) target = $region13
    $region12: #{tpu_custom_call.1} parent=1 // pred_region
      %43 = vsyncadd [#allocation7], 0
      %s45 = sshll.u32 %s2, 4
      %s46 = int_to_ptr.hbm [resolvable:$true] %s45
      %s47 = sshll.u32 [#allocation8], 4
      %s48 = int_to_ptr.vmem [resolvable:$true] %s47
      %50 = dma.hbm_to_vmem [thread:$0]  %s46, 32, %s48, [#allocation7]
    $region13: #{tpu_custom_call.1} parent=1 // pred_fallthru
      _
    // Predicated region
    $region14: #{tpu_custom_call.1} parent=1 // pred_check
      _
    $region15: #{tpu_custom_call.1} parent=1 // pred_check_branch
      %52 = sbr.rel (0) target = $region17
    $region16: #{tpu_custom_call.1} parent=1 // pred_region
      %54 = vsyncadd [#allocation10], 0
      %s55 = sshll.u32 %s3, 4
      %s56 = int_to_ptr.hbm [resolvable:$true] %s55
      %s57 = sshll.u32 [#allocation9], 4
      %s58 = int_to_ptr.vmem [resolvable:$true] %s57
      %63 = dma.hbm_to_vmem [thread:$0]  %s56, 4096, %s58, [#allocation10], 128, 128, 8
    $region17: #{tpu_custom_call.1} parent=1 // pred_fallthru
      _
    // Predicated region
    $region18: #{tpu_custom_call.1} parent=1 // pred_check
      _
    $region19: #{tpu_custom_call.1} parent=1 // pred_check_branch
      %65 = sbr.rel (0) target = $region21
    $region20: #{tpu_custom_call.1} parent=1 // pred_region
      _
    $region21: #{tpu_custom_call.1} parent=1 // pred_fallthru
      _
    // Predicated region
    $region22: #{tpu_custom_call.1} parent=1 // pred_check
      _
    $region23: #{tpu_custom_call.1} parent=1 // pred_check_branch
      %67 = sbr.rel (0) target = $region25
    $region24: #{tpu_custom_call.1} parent=1 // pred_region
      %69 = dma.done [#allocation4], 384
    $region25: #{tpu_custom_call.1} parent=1 // pred_fallthru
      _
    // Predicated region
    $region26: #{tpu_custom_call.1} parent=1 // pred_check
      _
    $region27: #{tpu_custom_call.1} parent=1 // pred_check_branch
      %71 = sbr.rel (0) target = $region29
    $region28: #{tpu_custom_call.1} parent=1 // pred_region
      %73 = dma.done [#allocation7], 4096
    $region29: #{tpu_custom_call.1} parent=1 // pred_fallthru
      _
    // Predicated region
    $region30: #{tpu_custom_call.1} parent=1 // pred_check
      _
    $region31: #{tpu_custom_call.1} parent=1 // pred_check_branch
      %75 = sbr.rel (0) target = $region33
    $region32: #{tpu_custom_call.1} parent=1 // pred_region
      %77 = dma.done [#allocation7], 32
    $region33: #{tpu_custom_call.1} parent=1 // pred_fallthru
      _
    // Predicated region
    $region34: #{tpu_custom_call.1} parent=1 // pred_check
      _
    $region35: #{tpu_custom_call.1} parent=1 // pred_check_branch
      %79 = sbr.rel (0) target = $region37
    $region36: #{tpu_custom_call.1} parent=1 // pred_region
      %81 = dma.done [#allocation10], 4096
    $region37: #{tpu_custom_call.1} parent=1 // pred_fallthru
      _
    %v82 = vld [vmem:[#allocation3] sm:$0xff]
    %v83 = vld [vmem:[#allocation3 + $0x8] sm:$0xff]
    %v84 = vld [vmem:[#allocation3 + $0x10] sm:$0xff]
    %85 = vst [vmem:[#allocation2] sm:$0xff] 0.0
    %86 = vst [vmem:[#allocation2 + $0x8] sm:$0xff] 0.0
    %87 = vst [vmem:[#allocation2 + $0x10] sm:$0xff] 0.0
    %v88 = vld [vmem:[#allocation6] sm:$0xff]
    %v89 = vld [vmem:[#allocation6 + $0x10] sm:$0xff]
    %v90 = vld [vmem:[#allocation6 + $0x20] sm:$0xff]
    %v91 = vld [vmem:[#allocation6 + $0x30] sm:$0xff]
    %v92 = vld [vmem:[#allocation6 + $0x40] sm:$0xff]
    %v93 = vld [vmem:[#allocation6 + $0x50] sm:$0xff]
    %v94 = vld [vmem:[#allocation6 + $0x60] sm:$0xff]
    %v95 = vld [vmem:[#allocation6 + $0x70] sm:$0xff]
    %v96 = vld [vmem:[#allocation6 + $0x80] sm:$0xff]
    %v97 = vld [vmem:[#allocation6 + $0x90] sm:$0xff]
    %v98 = vld [vmem:[#allocation6 + $0xa0] sm:$0xff]
    %v99 = vld [vmem:[#allocation6 + $0xb0] sm:$0xff]
    %v100 = vld [vmem:[#allocation6 + $0xc0] sm:$0xff]
    %v101 = vld [vmem:[#allocation6 + $0xd0] sm:$0xff]
    %v102 = vld [vmem:[#allocation6 + $0xe0] sm:$0xff]
    %v103 = vld [vmem:[#allocation6 + $0xf0] sm:$0xff]
    %v104 = vld [vmem:[#allocation8] sm:$0x1]
    %v106 = vperm.slane %v104, 0
    %108 = vmatpush.msra.mxu0 %v103
    %109 = vmatpush.msra.mxu0 %v102
    %110 = vmatpush.msra.mxu0 %v101
    %111 = vmatpush.msra.mxu0 %v100
    %112 = vmatpush.msra.mxu0 %v99
    %113 = vmatpush.msra.mxu0 %v98
    %114 = vmatpush.msra.mxu0 %v97
    %115 = vmatpush.msra.mxu0 %v96
    %116 = vmatpush.msra.mxu0 %v95
    %117 = vmatpush.msra.mxu0 %v94
    %118 = vmatpush.msra.mxu0 %v93
    %119 = vmatpush.msra.mxu0 %v92
    %120 = vmatpush.msra.mxu0 %v91
    %121 = vmatpush.msra.mxu0 %v90
    %122 = vmatpush.msra.mxu0 %v89
    %123 = vmatpush.msra.mxu0 %v88
    %124 = vmatmul.f32.gmra.mxu0 %v82
    %v125 = vpop.f32.mrf.mxu0
    %v126 = vadd.f32 %v106, %v125
    %127 = vmatmul.f32.gmra.mxu0 %v83
    %v128 = vpop.f32.mrf.mxu0
    %v129 = vadd.f32 %v106, %v128
    %130 = vmatmul.f32.gmra.mxu0 %v84
    %v131 = vpop.f32.mrf.mxu0
    %v132 = vadd.f32 %v106, %v131
    %133 = vdwg.mxu0
    %v134 = vmax.f32 %v126, 0.0
    %v135 = vmax.f32 %v129, 0.0
    %v136 = vmax.f32 %v132, 0.0
    %v137 = vld [vmem:[#allocation2] sm:$0xff]
    %v138 = vld [vmem:[#allocation2 + $0x8] sm:$0xff]
    %v139 = vld [vmem:[#allocation2 + $0x10] sm:$0xff]
    %v140 = vld [vmem:[#allocation9] sm:$0xff]
    %v141 = vld [vmem:[#allocation9 + $0x8] sm:$0xff]
    %v142 = vld [vmem:[#allocation9 + $0x10] sm:$0xff]
    %v143 = vld [vmem:[#allocation9 + $0x18] sm:$0xff]
    %v144 = vld [vmem:[#allocation9 + $0x20] sm:$0xff]
    %v145 = vld [vmem:[#allocation9 + $0x28] sm:$0xff]
    %v146 = vld [vmem:[#allocation9 + $0x30] sm:$0xff]
    %v147 = vld [vmem:[#allocation9 + $0x38] sm:$0xff]
    %v148 = vld [vmem:[#allocation9 + $0x40] sm:$0xff]
    %v149 = vld [vmem:[#allocation9 + $0x48] sm:$0xff]
    %v150 = vld [vmem:[#allocation9 + $0x50] sm:$0xff]
    %v151 = vld [vmem:[#allocation9 + $0x58] sm:$0xff]
    %v152 = vld [vmem:[#allocation9 + $0x60] sm:$0xff]
    %v153 = vld [vmem:[#allocation9 + $0x68] sm:$0xff]
    %v154 = vld [vmem:[#allocation9 + $0x70] sm:$0xff]
    %v155 = vld [vmem:[#allocation9 + $0x78] sm:$0xff]
    %156 = vmatpush.msra.mxu0 %v155
    %157 = vmatpush.msra.mxu0 %v154
    %158 = vmatpush.msra.mxu0 %v153
    %159 = vmatpush.msra.mxu0 %v152
    %160 = vmatpush.msra.mxu0 %v151
    %161 = vmatpush.msra.mxu0 %v150
    %162 = vmatpush.msra.mxu0 %v149
    %163 = vmatpush.msra.mxu0 %v148
    %164 = vmatpush.msra.mxu0 %v147
    %165 = vmatpush.msra.mxu0 %v146
    %166 = vmatpush.msra.mxu0 %v145
    %167 = vmatpush.msra.mxu0 %v144
    %168 = vmatpush.msra.mxu0 %v143
    %169 = vmatpush.msra.mxu0 %v142
    %170 = vmatpush.msra.mxu0 %v141
    %171 = vmatpush.msra.mxu0 %v140
    %172 = vmatmul.f32.gmra.mxu0 %v134
    %v173 = vpop.f32.mrf.mxu0
    %v174 = vadd.f32 0.0, %v173
    %175 = vmatmul.f32.gmra.mxu0 %v135
    %v176 = vpop.f32.mrf.mxu0
    %v177 = vadd.f32 0.0, %v176
    %178 = vmatmul.f32.gmra.mxu0 %v136
    %v179 = vpop.f32.mrf.mxu0
    %v180 = vadd.f32 0.0, %v179
    %181 = vdwg.mxu0
    %v182 = vadd.f32 %v137, %v174
    %v183 = vadd.f32 %v138, %v177
    %v184 = vadd.f32 %v139, %v180
    %185 = vst [vmem:[#allocation2] sm:$0xff] %v182
    %186 = vst [vmem:[#allocation2 + $0x8] sm:$0xff] %v183
    %187 = vst [vmem:[#allocation2 + $0x10] sm:$0xff] %v184
    %s188 = scalar_lea.vmem [#allocation6], 8
    %v189 = vld [vmem:[%s188] sm:$0xff]
    %v190 = vld [vmem:[%s188 + $0x10] sm:$0xff]
    %v191 = vld [vmem:[%s188 + $0x20] sm:$0xff]
    %v192 = vld [vmem:[%s188 + $0x30] sm:$0xff]
    %v193 = vld [vmem:[%s188 + $0x40] sm:$0xff]
    %v194 = vld [vmem:[%s188 + $0x50] sm:$0xff]
    %v195 = vld [vmem:[%s188 + $0x60] sm:$0xff]
    %v196 = vld [vmem:[%s188 + $0x70] sm:$0xff]
    %v197 = vld [vmem:[%s188 + $0x80] sm:$0xff]
    %v198 = vld [vmem:[%s188 + $0x90] sm:$0xff]
    %v199 = vld [vmem:[%s188 + $0xa0] sm:$0xff]
    %v200 = vld [vmem:[%s188 + $0xb0] sm:$0xff]
    %v201 = vld [vmem:[%s188 + $0xc0] sm:$0xff]
    %v202 = vld [vmem:[%s188 + $0xd0] sm:$0xff]
    %v203 = vld [vmem:[%s188 + $0xe0] sm:$0xff]
    %v204 = vld [vmem:[%s188 + $0xf0] sm:$0xff]
    %s205 = scalar_lea.vmem [#allocation8], 1
    %v206 = vld [vmem:[%s205] sm:$0x1]
    %v208 = vperm.slane %v206, 0
    %210 = vmatpush.msra.mxu0 %v204
    %211 = vmatpush.msra.mxu0 %v203
    %212 = vmatpush.msra.mxu0 %v202
    %213 = vmatpush.msra.mxu0 %v201
    %214 = vmatpush.msra.mxu0 %v200
    %215 = vmatpush.msra.mxu0 %v199
    %216 = vmatpush.msra.mxu0 %v198
    %217 = vmatpush.msra.mxu0 %v197
    %218 = vmatpush.msra.mxu0 %v196
    %219 = vmatpush.msra.mxu0 %v195
    %220 = vmatpush.msra.mxu0 %v194
    %221 = vmatpush.msra.mxu0 %v193
    %222 = vmatpush.msra.mxu0 %v192
    %223 = vmatpush.msra.mxu0 %v191
    %224 = vmatpush.msra.mxu0 %v190
    %225 = vmatpush.msra.mxu0 %v189
    %226 = vmatmul.f32.gmra.mxu0 %v82
    %v227 = vpop.f32.mrf.mxu0
    %v228 = vadd.f32 %v208, %v227
    %229 = vmatmul.f32.gmra.mxu0 %v83
    %v230 = vpop.f32.mrf.mxu0
    %v231 = vadd.f32 %v208, %v230
    %232 = vmatmul.f32.gmra.mxu0 %v84
    %v233 = vpop.f32.mrf.mxu0
    %v234 = vadd.f32 %v208, %v233
    %235 = vdwg.mxu0
    %v236 = vmax.f32 %v228, 0.0
    %v237 = vmax.f32 %v231, 0.0
    %v238 = vmax.f32 %v234, 0.0
    %v239 = vld [vmem:[#allocation2] sm:$0xff]
    %v240 = vld [vmem:[#allocation2 + $0x8] sm:$0xff]
    %v241 = vld [vmem:[#allocation2 + $0x10] sm:$0xff]
    %s242 = scalar_lea.vmem [#allocation9], 128
    %v243 = vld [vmem:[%s242] sm:$0xff]
    %v244 = vld [vmem:[%s242 + $0x8] sm:$0xff]
    %v245 = vld [vmem:[%s242 + $0x10] sm:$0xff]
    %v246 = vld [vmem:[%s242 + $0x18] sm:$0xff]
    %v247 = vld [vmem:[%s242 + $0x20] sm:$0xff]
    %v248 = vld [vmem:[%s242 + $0x28] sm:$0xff]
    %v249 = vld [vmem:[%s242 + $0x30] sm:$0xff]
    %v250 = vld [vmem:[%s242 + $0x38] sm:$0xff]
    %v251 = vld [vmem:[%s242 + $0x40] sm:$0xff]
    %v252 = vld [vmem:[%s242 + $0x48] sm:$0xff]
    %v253 = vld [vmem:[%s242 + $0x50] sm:$0xff]
    %v254 = vld [vmem:[%s242 + $0x58] sm:$0xff]
    %v255 = vld [vmem:[%s242 + $0x60] sm:$0xff]
    %v256 = vld [vmem:[%s242 + $0x68] sm:$0xff]
    %v257 = vld [vmem:[%s242 + $0x70] sm:$0xff]
    %v258 = vld [vmem:[%s242 + $0x78] sm:$0xff]
    %259 = vmatpush.msra.mxu0 %v258
    %260 = vmatpush.msra.mxu0 %v257
    %261 = vmatpush.msra.mxu0 %v256
    %262 = vmatpush.msra.mxu0 %v255
    %263 = vmatpush.msra.mxu0 %v254
    %264 = vmatpush.msra.mxu0 %v253
    %265 = vmatpush.msra.mxu0 %v252
    %266 = vmatpush.msra.mxu0 %v251
    %267 = vmatpush.msra.mxu0 %v250
    %268 = vmatpush.msra.mxu0 %v249
    %269 = vmatpush.msra.mxu0 %v248
    %270 = vmatpush.msra.mxu0 %v247
    %271 = vmatpush.msra.mxu0 %v246
    %272 = vmatpush.msra.mxu0 %v245
    %273 = vmatpush.msra.mxu0 %v244
    %274 = vmatpush.msra.mxu0 %v243
    %275 = vmatmul.f32.gmra.mxu0 %v236
    %v276 = vpop.f32.mrf.mxu0
    %v277 = vadd.f32 0.0, %v276
    %278 = vmatmul.f32.gmra.mxu0 %v237
    %v279 = vpop.f32.mrf.mxu0
    %v280 = vadd.f32 0.0, %v279
    %281 = vmatmul.f32.gmra.mxu0 %v238
    %v282 = vpop.f32.mrf.mxu0
    %v283 = vadd.f32 0.0, %v282
    %284 = vdwg.mxu0
    %v285 = vadd.f32 %v239, %v277
    %v286 = vadd.f32 %v240, %v280
    %v287 = vadd.f32 %v241, %v283
    %288 = vst [vmem:[#allocation2] sm:$0xff] %v285
    %289 = vst [vmem:[#allocation2 + $0x8] sm:$0xff] %v286
    %290 = vst [vmem:[#allocation2 + $0x10] sm:$0xff] %v287
    %v291 = vld [vmem:[#allocation2] sm:$0xff]
    %v292 = vld [vmem:[#allocation2 + $0x8] sm:$0xff]
    %v293 = vld [vmem:[#allocation2 + $0x10] sm:$0xff]
    %v294 = vld [vmem:[%s4] sm:$0x1]
    %v296 = vperm.slane %v294, 0
    %v298 = vadd.f32 %v291, %v296
    %v299 = vadd.f32 %v292, %v296
    %v300 = vadd.f32 %v293, %v296
    %301 = vst [vmem:[#allocation11] sm:$0xff] %v298
    %302 = vst [vmem:[#allocation11 + $0x8] sm:$0xff] %v299
    %303 = vst [vmem:[#allocation11 + $0x10] sm:$0xff] %v300
    // Predicated region
    $region38: #{tpu_custom_call.1} parent=1 // pred_check
      _
    $region39: #{tpu_custom_call.1} parent=1 // pred_check_branch
      %305 = sbr.rel (0) target = $region41
    $region40: #{tpu_custom_call.1} parent=1 // pred_region
      %307 = vsyncadd [#allocation5], 0
      %s308 = sshll.u32 [#allocation11], 4
      %s309 = int_to_ptr.vmem [resolvable:$true] %s308
      %s310 = sshll.u32 %s5, 4
      %s311 = int_to_ptr.hbm [resolvable:$true] %s310
      %316 = dma.vmem_to_hbm [thread:$0]  %s309, 384, %s311, [#allocation5], 128, 128, 8
    $region41: #{tpu_custom_call.1} parent=1 // pred_fallthru
      _
    // Predicated region
    $region42: #{tpu_custom_call.1} parent=1 // pred_check
      _
    $region43: #{tpu_custom_call.1} parent=1 // pred_check_branch
      %318 = sbr.rel (0) target = $region45
    $region44: #{tpu_custom_call.1} parent=1 // pred_region
      %320 = dma.done [#allocation5], 384
    $region45: #{tpu_custom_call.1} parent=1 // pred_fallthru
      _
    %321 = vsyncpa [#allocation4], 1
    %322 = vsyncpa [#allocation7], 1
    %323 = vsyncpa [#allocation10], 1
    %324 = vsyncpa [#allocation5], 1

</llo_original>
